<compile_context>
chip_gen: v6e
topology: v6e:2x2x1
jax: 0.10.0
libtpu: 0.0.40
codegen_flags: <defaults>
</compile_context>

<pallas_src>
import functools

import jax
import jax.numpy as jnp
from jax import lax
from jax.experimental import pallas as pl
from jax.experimental.pallas import tpu as pltpu

TEMPERATURE = 0.5
COS_EPS = 1e-8  # torch.nn.CosineSimilarity default eps


def _round_up(x: int, m: int) -> int:
    return (x + m - 1) // m * m


def _ntxent_kernel(z_ref, out_ref, *, n, two_n, temperature, block_rows):
    # z_ref  : (rows_pad, Dp) bf16, rows already L2-normalized (padded rows are 0).
    # out_ref: (TM, 1) f32 per-row losses for this stripe.
    i = pl.program_id(0)
    row0 = pl.multiple_of(i * block_rows, block_rows)

    zc = z_ref[...]                                   # (rows_pad, Dp) bf16, resident
    zr = z_ref[pl.ds(row0, block_rows), :]            # (TM, Dp) bf16 stripe rows

    # (TM, rows_pad) similarity stripe on the MXU: bf16 operands, f32 accumulation,
    # contraction on D for both operands (q @ k^T pattern, no transpose).
    sim = lax.dot_general(
        zr, zc,
        dimension_numbers=(((1,), (1,)), ((), ())),
        preferred_element_type=jnp.float32,
    ) * jnp.float32(1.0 / temperature)

    tm, cols = sim.shape
    grow = lax.broadcasted_iota(jnp.int32, (tm, cols), 0) + row0
    gcol = lax.broadcasted_iota(jnp.int32, (tm, cols), 1)

    # Positive logit = sim[i, (i + N) mod 2N], extracted by one-hot select
    # (same matrix entry torch's CrossEntropyLoss reads).  For valid rows the
    # positive column is never the diagonal nor a padded column.
    pcol = jnp.where(grow < n, grow + n, grow - n)
    pos = jnp.sum(jnp.where(gcol == pcol, sim, 0.0), axis=-1, keepdims=True)  # (TM, 1)

    # Mask self-similarity (diagonal) and padded columns, then stable logsumexp.
    neg_inf = jnp.float32(-jnp.inf)
    masked = jnp.where((gcol == grow) | (gcol >= two_n), neg_inf, sim)
    row_max = jnp.max(masked, axis=-1, keepdims=True)
    lse = jnp.log(jnp.sum(jnp.exp(masked - row_max), axis=-1, keepdims=True)) + row_max

    per_row = lse - pos                                                        # (TM, 1)
    # Zero out padded rows so the wrapper can just sum and divide by 2N.
    row_idx = lax.broadcasted_iota(jnp.int32, (tm, 1), 0) + row0
    out_ref[...] = jnp.where(row_idx < two_n, per_row, jnp.float32(0.0))


def ntxent_loss(z1: jax.Array, z2: jax.Array, *, temperature: float = TEMPERATURE,
                block_rows: int = 128) -> jax.Array:
    """NT-Xent loss; semantics match the PyTorch NTXentLoss.forward."""
    assert z1.shape == z2.shape and z1.ndim == 2
    n, d = z1.shape
    two_n = 2 * n

    # Normalize once (f32), then hand unit vectors to the kernel in bf16.
    z = jnp.concatenate([z1, z2], axis=0).astype(jnp.float32)        # (2N, D)
    sq = jnp.sum(z * z, axis=-1, keepdims=True)
    z_hat = (z * lax.rsqrt(jnp.maximum(sq, jnp.float32(COS_EPS * COS_EPS))))
    z_hat = z_hat.astype(jnp.bfloat16)

    # Pad D to a lane multiple (zeros are neutral for dots) and rows to a
    # multiple of the stripe size (padded rows are all-zero).
    d_pad = _round_up(max(d, 1), 128)
    tm = block_rows if two_n >= block_rows else _round_up(two_n, 8)
    rows_pad = _round_up(two_n, tm)
    z_hat = jnp.pad(z_hat, ((0, rows_pad - two_n), (0, d_pad - d)))

    num_stripes = rows_pad // tm
    kernel = functools.partial(_ntxent_kernel, n=n, two_n=two_n,
                               temperature=temperature, block_rows=tm)

    per_row = pl.pallas_call(
        kernel,
        out_shape=jax.ShapeDtypeStruct((rows_pad, 1), jnp.float32),
        grid=(num_stripes,),
        in_specs=[
            pl.BlockSpec((rows_pad, d_pad), lambda i: (0, 0)),  # full z_hat, resident (no re-DMA)
        ],
        out_specs=pl.BlockSpec((tm, 1), lambda i: (i, 0)),
        compiler_params=pltpu.CompilerParams(
            dimension_semantics=("parallel",),        # row stripes are independent (megacore)
            vmem_limit_bytes=48 * 1024 * 1024,        # headroom above scoped default, < v7x 64 MiB
        ),
    )(z_hat)

    return jnp.sum(per_row) / two_n


def _ntxent_reference(z1, z2):
    """Pure-JAX f32 reference for correctness checking."""
    z = jnp.concatenate([z1, z2], axis=0).astype(jnp.float32)
    n = z1.shape[0]
    two_n = 2 * n
    nrm = jnp.sqrt(jnp.sum(z * z, axis=-1, keepdims=True))
    sim = (z @ z.T) / jnp.maximum(nrm * nrm.T, COS_EPS) / TEMPERATURE
    sim = jnp.where(jnp.eye(two_n, dtype=bool), -jnp.inf, sim)
    labels = jnp.concatenate([jnp.arange(n) + n, jnp.arange(n)])
    lse = jax.scipy.special.logsumexp(sim, axis=-1)
    pos = sim[jnp.arange(two_n), labels]
    return jnp.mean(lse - pos)


if __name__ == "__main__":
    key = jax.random.PRNGKey(0)
    k1, k2 = jax.random.split(key)
    N, D = 8, 32  # small SimCLR projection-head outputs
    z1 = jax.random.normal(k1, (N, D), dtype=jnp.float32)
    z2 = jax.random.normal(k2, (N, D), dtype=jnp.float32)

    loss = jax.block_until_ready(ntxent_loss(z1, z2))
    ref = jax.block_until_ready(_ntxent_reference(z1, z2))

    assert jnp.isfinite(loss), f"non-finite loss: {loss}"
    # bf16 MXU operands perturb logits at ~1e-3..1e-2 -> loosened tolerance.
    assert jnp.abs(loss - ref) < 3e-2, f"mismatch: kernel={loss} ref={ref}"
    print("KERNEL_OK")
</pallas_src>

<mosaic_0001>
module attributes {stable_mosaic.version = 11 : i64} {
  func.func @_ntxent_kernel(%arg0: i32, %arg1: memref<16x128xbf16, #tpu.memory_space<vmem>>, %arg2: memref<16x1xf32, #tpu.memory_space<vmem>>) attributes {dimension_semantics = [#tpu.dimension_semantics<parallel>], iteration_bounds = array<i64: 1>, scalar_prefetch = 0 : i64, scratch_operands = 0 : i64, tpu.core_type = #tpu.core_type<tc>, window_params = [{pipeline_mode = #tpu.pipeline_mode<synchronous>, transform_indices = @transform_0, window_bounds = array<i64: 16, 128>}, {transform_indices = @transform_1, window_bounds = array<i64: 16, 1>}]} {
    %c16_i32 = arith.constant 16 : i32
    %0 = arith.muli %arg0, %c16_i32 : i32
    %1 = tpu.assume_multiple %0, 16 : i32
    %c0 = arith.constant 0 : index
    %c0_0 = arith.constant 0 : index
    %2 = vector.load %arg1[%c0, %c0_0] : memref<16x128xbf16, #tpu.memory_space<vmem>>, vector<16x128xbf16>
    %3 = arith.index_cast %1 : i32 to index
    %c0_1 = arith.constant 0 : index
    %4 = vector.load %arg1[%3, %c0_1] : memref<16x128xbf16, #tpu.memory_space<vmem>>, vector<16x128xbf16>
    %cst = arith.constant dense<0.000000e+00> : vector<16x16xf32>
    %5 = tpu.matmul %4, %2, %cst {dimension_numbers = #tpu.dot_dimension_numbers<[1], [1], [0], [0], [0, 0, 1, 0], [], []>} : vector<16x128xbf16>, vector<16x128xbf16>, vector<16x16xf32> -> vector<16x16xf32>
    %cst_2 = arith.constant 2.000000e+00 : f32
    %6 = vector.broadcast %cst_2 : f32 to vector<16x16xf32>
    %7 = arith.mulf %5, %6 : vector<16x16xf32>
    %8 = tpu.iota {dimensions = array<i32: 0>} : vector<16x16xi32>
    %9 = vector.broadcast %1 : i32 to vector<16x16xi32>
    %10 = arith.addi %8, %9 : vector<16x16xi32>
    %11 = tpu.iota {dimensions = array<i32: 1>} : vector<16x16xi32>
    %c8_i32 = arith.constant 8 : i32
    %12 = vector.broadcast %c8_i32 : i32 to vector<16x16xi32>
    %13 = arith.cmpi slt, %10, %12 : vector<16x16xi32>
    %c8_i32_3 = arith.constant 8 : i32
    %14 = vector.broadcast %c8_i32_3 : i32 to vector<16x16xi32>
    %15 = arith.addi %10, %14 : vector<16x16xi32>
    %c8_i32_4 = arith.constant 8 : i32
    %16 = vector.broadcast %c8_i32_4 : i32 to vector<16x16xi32>
    %17 = arith.subi %10, %16 : vector<16x16xi32>
    %18 = arith.select %13, %15, %17 : vector<16x16xi1>, vector<16x16xi32>
    %19 = arith.cmpi eq, %11, %18 : vector<16x16xi32>
    %cst_5 = arith.constant 0.000000e+00 : f32
    %20 = vector.broadcast %cst_5 : f32 to vector<16x16xf32>
    %21 = arith.select %19, %7, %20 : vector<16x16xi1>, vector<16x16xf32>
    %cst_6 = arith.constant dense<0.000000e+00> : vector<16xf32>
    %22 = vector.multi_reduction <add>, %21, %cst_6 [1] : vector<16x16xf32> to vector<16xf32>
    %23 = vector.shape_cast %22 : vector<16xf32> to vector<16x1xf32>
    %24 = arith.cmpi eq, %11, %10 : vector<16x16xi32>
    %c16_i32_7 = arith.constant 16 : i32
    %25 = vector.broadcast %c16_i32_7 : i32 to vector<16x16xi32>
    %26 = arith.cmpi sge, %11, %25 : vector<16x16xi32>
    %27 = arith.ori %24, %26 : vector<16x16xi1>
    %cst_8 = arith.constant 0xFF800000 : f32
    %28 = vector.broadcast %cst_8 : f32 to vector<16x16xf32>
    %29 = arith.select %27, %28, %7 : vector<16x16xi1>, vector<16x16xf32>
    %cst_9 = arith.constant dense<0xFF800000> : vector<16xf32>
    %30 = vector.multi_reduction <maximumf>, %29, %cst_9 [1] : vector<16x16xf32> to vector<16xf32>
    %31 = vector.shape_cast %30 : vector<16xf32> to vector<16x1xf32>
    %32 = vector.broadcast %31 : vector<16x1xf32> to vector<16x16xf32>
    %33 = arith.subf %29, %32 : vector<16x16xf32>
    %34 = math.exp %33 : vector<16x16xf32>
    %cst_10 = arith.constant dense<0.000000e+00> : vector<16xf32>
    %35 = vector.multi_reduction <add>, %34, %cst_10 [1] : vector<16x16xf32> to vector<16xf32>
    %36 = vector.shape_cast %35 : vector<16xf32> to vector<16x1xf32>
    %37 = math.log %36 : vector<16x1xf32>
    %38 = arith.addf %37, %31 : vector<16x1xf32>
    %39 = arith.subf %38, %23 : vector<16x1xf32>
    %40 = tpu.iota {dimensions = array<i32: 0>} : vector<16x1xi32>
    %41 = vector.broadcast %1 : i32 to vector<16x1xi32>
    %42 = arith.addi %40, %41 : vector<16x1xi32>
    %c16_i32_11 = arith.constant 16 : i32
    %43 = vector.broadcast %c16_i32_11 : i32 to vector<16x1xi32>
    %44 = arith.cmpi slt, %42, %43 : vector<16x1xi32>
    %cst_12 = arith.constant 0.000000e+00 : f32
    %45 = vector.broadcast %cst_12 : f32 to vector<16x1xf32>
    %46 = arith.select %44, %39, %45 : vector<16x1xi1>, vector<16x1xf32>
    %c0_13 = arith.constant 0 : index
    %c0_14 = arith.constant 0 : index
    %47 = vector.load %arg2[%c0_13, %c0_14] : memref<16x1xf32, #tpu.memory_space<vmem>>, vector<16x1xf32>
    tpu.vector_store %arg2[%c0_13, %c0_14], %46 {strides = array<i32>} : memref<16x1xf32, #tpu.memory_space<vmem>>, vector<16x1xf32>,
    return
  }
  func.func @transform_0(%arg0: i32) -> (i32, i32) {
    %c0_i32 = arith.constant 0 : i32
    %c0_i32_0 = arith.constant 0 : i32
    %c0_i32_1 = arith.constant 0 : i32
    return %c0_i32, %c0_i32_0 : i32, i32
  }
  func.func @transform_1(%arg0: i32) -> (i32, i32) {
    %c0_i32 = arith.constant 0 : i32
    %c0_i32_0 = arith.constant 0 : i32
    return %arg0, %c0_i32 : i32, i32
  }
}

</mosaic_0001>

<llo_original>
// kernel: tpu_custom_call.1
$region0: #{tpu_custom_call.1}
  #allocation0 [shape = 'u32[]', space=smem, size = 0x4, offset = 0x4, fixed_abs, tag = 'smem constant byte address 0x4 - core index']
  #allocation1 [shape = 'u32[144,128]{1,0:T(1,128)}', space=vmem, size = 0x12000, scoped, tag = 'internal scratch']
  %s0 = inlined_call_operand.hbm [shape: bf16[16,128], index: 0, kind: input, shape index: {}]
  %s1 = inlined_call_operand.vmem [shape: f32[16,1], index: 1, kind: output, shape index: {}]
  %s2 = sld [smem:[#allocation0]]
  $region18: #{tpu_custom_call.1} parent=0
    _
  %s4 = ssub.s32 1, %s2
  %s5 = scalar_select 0, %s4, %s2
  $region1: #{tpu_custom_call.1} parent=0
    #allocation2 [shape = 'u8[4096]{0}', space=vmem, size = 0x1000, scoped, tag = 'input window, operand 0, single buffered']
    #allocation3 [shape = 's32[1]{0}', space=sflag, size = 0x4, scoped, tag = 'scoped memory for tpu_custom_call.1']
    %6 = vsyncpa [#allocation3], 0
    // Predicated region
    $region2: #{tpu_custom_call.1} parent=1 // pred_check
      _
    $region3: #{tpu_custom_call.1} parent=1 // pred_check_branch
      %8 = sbr.rel (0) target = $region5
    $region4: #{tpu_custom_call.1} parent=1 // pred_region
      %s10 = ssub.s32 128, 128
      %11 = vsyncadd [#allocation3], %s10
      %s12 = sshll.u32 [#allocation2], 4
      %s13 = int_to_ptr.vmem [resolvable:$true] %s12
      %18 = dma.hbm_to_vmem [thread:$0]  %s0, 128, %s13, [#allocation3], 64, 64, 4
    $region5: #{tpu_custom_call.1} parent=1 // pred_fallthru
      _
    // Predicated region
    $region6: #{tpu_custom_call.1} parent=1 // pred_check
      _
    $region7: #{tpu_custom_call.1} parent=1 // pred_check_branch
      %20 = sbr.rel (0) target = $region9
    $region8: #{tpu_custom_call.1} parent=1 // pred_region
      %21 = dma.done [#allocation3], 128
    $region9: #{tpu_custom_call.1} parent=1 // pred_fallthru
      _
    %s23 = smul.u32 0, 16
    %v24 = vld [vmem:[#allocation2] sm:$0xf]
    %v25 = vld [vmem:[#allocation2 + $0x4] sm:$0xf]
    %s26 = sshra.s32 %s23, 3
    %s27 = sand.u32 %s23, 7
    %s28 = smul.addr %s26, 4
    %s29 = scalar_lea.vmem [#allocation2], %s28
    %v30 = vld [vmem:[%s29] sm:$0xf]
    %v31 = vld [vmem:[%s29 + $0x4] sm:$0xf]
    %v34 = vunpack.c.l.b16 %v30
    %v35 = vunpack.c.l.b16 %v31
    %v36 = vpack.c.b16 %v35, %v34
    %v40 = vunpack.c.l.b16 %v24
    %v41 = vunpack.c.l.b16 %v25
    %v42 = vpack.c.b16 %v41, %v40
    %44 = vmatprep.subr.bf16.mxu0 0
    %45 = vmatpush1.bf16.xpose.msra.mxu0 0
    %46 = vmatprep.subr.bf16.mxu0 0
    %47 = vmatpush1.bf16.xpose.msra.mxu0 0
    %48 = vmatprep.subr.bf16.mxu0 0
    %49 = vmatpush1.bf16.xpose.msra.mxu0 0
    %50 = vmatprep.subr.bf16.mxu0 0
    %51 = vmatpush1.bf16.xpose.msra.mxu0 0
    %52 = vmatprep.subr.bf16.mxu0 0
    %53 = vmatpush1.bf16.xpose.msra.mxu0 0
    %54 = vmatprep.subr.bf16.mxu0 0
    %55 = vmatpush1.bf16.xpose.msra.mxu0 0
    %56 = vmatprep.subr.bf16.mxu0 0
    %57 = vmatpush1.bf16.xpose.msra.mxu0 0
    %58 = vmatprep.subr.bf16.mxu0 0
    %59 = vmatpush1.bf16.xpose.msra.mxu0 %v42
    %60 = vmatprep.subr.bf16.mxu0 0
    %61 = vmatpush2.bf16.xpose.msra.mxu0 0
    %62 = vmatprep.subr.bf16.mxu0 0
    %63 = vmatpush2.bf16.xpose.msra.mxu0 0
    %64 = vmatprep.subr.bf16.mxu0 0
    %65 = vmatpush2.bf16.xpose.msra.mxu0 0
    %66 = vmatprep.subr.bf16.mxu0 0
    %67 = vmatpush2.bf16.xpose.msra.mxu0 0
    %68 = vmatprep.subr.bf16.mxu0 0
    %69 = vmatpush2.bf16.xpose.msra.mxu0 0
    %70 = vmatprep.subr.bf16.mxu0 0
    %71 = vmatpush2.bf16.xpose.msra.mxu0 0
    %72 = vmatprep.subr.bf16.mxu0 0
    %73 = vmatpush2.bf16.xpose.msra.mxu0 0
    %74 = vmatprep.subr.bf16.mxu0 0
    %75 = vmatpush2.bf16.xpose.msra.mxu0 0
    %76 = vmatprep.mubr.bf16.mxu0 0
    %77 = vmatmul.mubr.bf16.gmra.mxu0 %v36
    %v78 = vpop.f32.mrf.mxu0
    %v79 = vadd.f32 0.0, %v78
    %v80 = vpop.f32.mrf.mxu0
    %v81 = vpop.f32.mrf.mxu0
    %v82 = vadd.f32 0.0, %v81
    %v83 = vpop.f32.mrf.mxu0
    %84 = vdwg.mxu0
    %v85 = vmul.f32 %v79, 2.0
    %v86 = vmul.f32 %v82, 2.0
    %v87 = vlaneseq
    %v88 = vshrl.u32 %v87, 7
    %v89 = vadd.s32 %v88, 8
    %v90 = vstv %s23
    %v91 = vadd.s32 %v88, %v90
    %v92 = vadd.s32 %v89, %v90
    %v93 = vlaneseq
    %v94 = vand.u32 %v93, 127
    %vm95 = vcmp.lt.s32.totalorder %v91, 8
    %vm96 = vcmp.lt.s32.totalorder %v92, 8
    %v97 = vadd.s32 %v91, 8
    %v98 = vadd.s32 %v92, 8
    %v99 = vsub.s32 %v91, 8
    %v100 = vsub.s32 %v92, 8
    %v101 = vsel %vm95, %v97, %v99
    %v102 = vsel %vm96, %v98, %v100
    %vm103 = vcmp.eq.s32.totalorder %v94, %v101
    %vm104 = vcmp.eq.s32.totalorder %v94, %v102
    %v105 = vsel %vm103, %v85, 0.0
    %v106 = vsel %vm104, %v86, 0.0
    %vm107 = vcmask 130048
    %v108 = vsel %vm107, %v105, 0.0
    %109 = vadd.xlane.f32.xlu0 %v108
    %v110 = vpop.xlane.xlu0 %109
    %v111 = vsel %vm107, %v106, 0.0
    %112 = vadd.xlane.f32.xlu0 %v111
    %v113 = vpop.xlane.xlu0 %112
    %vm114 = vcmp.eq.s32.totalorder %v94, %v91
    %vm115 = vcmp.eq.s32.totalorder %v94, %v92
    %vm116 = vcmp.ge.s32.totalorder %v94, 16
    %vm117 = vmor %vm114, %vm116
    %vm118 = vmor %vm115, %vm116
    %v119 = vsel %vm117, -inf, %v85
    %v120 = vsel %vm118, -inf, %v86
    %v121 = vsel %vm107, %v119, -inf
    %122 = vmax.xlane.f32.xlu0 %v121
    %v123 = vpop.xlane.xlu0 %122
    %v124 = vsel %vm107, %v120, -inf
    %125 = vmax.xlane.f32.xlu0 %v124
    %v126 = vpop.xlane.xlu0 %125
    %v127 = vsub.f32 %v119, %v123
    %v128 = vsub.f32 %v120, %v126
    %v129 = vmul.f32 %v127, 1.442695
    %v130 = vpow.pop %v129
    %v131 = vmul.f32 %v128, 1.442695
    %v132 = vpow.pop %v131
    %v133 = vsel %vm107, %v130, 0.0
    %134 = vadd.xlane.f32.xlu0 %v133
    %v135 = vpop.xlane.xlu0 %134
    %v136 = vsel %vm107, %v132, 0.0
    %137 = vadd.xlane.f32.xlu0 %v136
    %v138 = vpop.xlane.xlu0 %137
    %v139 = vlog2.pop %v135
    %v140 = vmul.f32 %v139, 0.6931472
    %v141 = vlog2.pop %v138
    %v142 = vmul.f32 %v141, 0.6931472
    %v143 = vadd.f32 %v140, %v123
    %v144 = vadd.f32 %v142, %v126
    %v145 = vsub.f32 %v143, %v110
    %v146 = vsub.f32 %v144, %v113
    %vm147 = vcmp.lt.s32.totalorder %v91, 16
    %vm148 = vcmp.lt.s32.totalorder %v92, 16
    %v149 = vsel %vm147, %v145, 0.0
    %v150 = vsel %vm148, %v146, 0.0
    %vm151 = vcmask 7168
    %152 = vst.msk [vmem:[%s1] sm:$0xff] %vm151, %v149
    %153 = vst.msk [vmem:[%s1 + $0x8] sm:$0xff] %vm151, %v150
    // Predicated region
    $region10: #{tpu_custom_call.1} parent=1 // pred_check
      _
    $region11: #{tpu_custom_call.1} parent=1 // pred_check_branch
      %155 = sbr.rel (0) target = $region13
    $region12: #{tpu_custom_call.1} parent=1 // pred_region
      _
    $region13: #{tpu_custom_call.1} parent=1 // pred_fallthru
      _
    // Predicated region
    $region14: #{tpu_custom_call.1} parent=1 // pred_check
      _
    $region15: #{tpu_custom_call.1} parent=1 // pred_check_branch
      %157 = sbr.rel (0) target = $region17
    $region16: #{tpu_custom_call.1} parent=1 // pred_region
      _
    $region17: #{tpu_custom_call.1} parent=1 // pred_fallthru
      _
    %158 = vsyncpa [#allocation3], 1

</llo_original>
